<compile_context>
chip_gen: v6e
topology: v6e:2x2x1
jax: 0.10.0
libtpu: 0.0.40
codegen_flags: <defaults>
</compile_context>

<pallas_src>
import jax
import jax.numpy as jnp
from jax.experimental import pallas as pl
from jax.experimental.pallas import tpu as pltpu


def _exposure_kernel(coef_ref, x_ref, o_ref):
    """Interleaved-RGB 3x3 exposure transform + clamp on one row-block.

    coef_ref: (6, C) lane-periodic coefficient rows, C = 3*W, c = lane % 3:
        row 0: M[c, c]              (tap x[j]   )
        row 1: M[c-1, c]  (c >= 1)  (tap x[j-1] )
        row 2: M[c-2, c]  (c == 2)  (tap x[j-2] )
        row 3: M[c+1, c]  (c <= 1)  (tap x[j+1] )
        row 4: M[c+2, c]  (c == 0)  (tap x[j+2] )
        row 5: b[c]                 (bias)
    x_ref, o_ref: (block_rows, C) interleaved RGB pixel rows.
    """
    x = x_ref[...]
    C = x.shape[-1]

    k0, kp1, kp2, km1, km2, bias = (coef_ref[i:i + 1, :] for i in range(6))

    # Guard against the lane-rotate sign convention: probe one vreg so the
    # coefficient/tap pairing is correct either way.  Under jnp.roll
    # semantics roll(iota, 1)[0] == 127; the wheres below are a handful of
    # vector selects on (1, C) rows -- negligible next to the HBM stream.
    probe = jax.lax.broadcasted_iota(jnp.int32, (8, 128), 1)
    std = pltpu.roll(probe, shift=1, axis=1)[:1, :1] == 127     # (1, 1) bool

    c_s1 = jnp.where(std, kp1, km1)   # paired with roll(x, 1)
    c_s2 = jnp.where(std, kp2, km2)   # paired with roll(x, 2)
    c_o1 = jnp.where(std, km1, kp1)   # paired with roll(x, C-1)
    c_o2 = jnp.where(std, km2, kp2)   # paired with roll(x, C-2)

    # All wrapped-around lanes land where the paired coefficient is zero
    # (each output lane only taps the 3 lanes of its own pixel), so the
    # whole-row rotations are safe.
    y = k0 * x + bias
    y += c_s1 * pltpu.roll(x, shift=1, axis=1)       # x[j-1] (std convention)
    y += c_s2 * pltpu.roll(x, shift=2, axis=1)       # x[j-2]
    y += c_o1 * pltpu.roll(x, shift=C - 1, axis=1)   # x[j+1]
    y += c_o2 * pltpu.roll(x, shift=C - 2, axis=1)   # x[j+2]

    o_ref[...] = jnp.clip(y, 0.0, 1.0).astype(o_ref.dtype)


def _pick_block_rows(h, row_bytes, target_bytes=4 << 20, min_steps=4):
    """Rows per grid step: multiple of 8, ~target_bytes per block, and keep
    at least `min_steps` grid steps so both v7x TensorCores get work and the
    DMA pipeline has iterations to overlap."""
    if h <= 8:
        return h
    rows = min(h, max(8, target_bytes // row_bytes))
    rows = max(8, (rows // 8) * 8)
    if h >= 8 * min_steps:
        rows = min(rows, (h // min_steps // 8) * 8)
    return rows


@jax.jit
def _exposure_forward(image, exposure_factor, indices):
    H, W, nch = image.shape
    if nch != 3:
        raise ValueError("image must be (H, W, 3) channels-last")

    ef = exposure_factor[indices[0]].astype(jnp.float32)   # (3, 4)
    M = ef[:, :3]          # out[..., c] = sum_k image[..., k] * M[k, c]
    b = ef[:, 3]
    zero = jnp.zeros((), jnp.float32)

    C = 3 * W
    phase = jnp.arange(C, dtype=jnp.int32) % 3              # channel of lane j
    # (6, 3) per-channel value table -> (6, C) lane-periodic coefficient rows.
    tbl = jnp.stack([
        jnp.stack([M[0, 0], M[1, 1], M[2, 2]]),   # tap x[j]
        jnp.stack([zero,    M[0, 1], M[1, 2]]),   # tap x[j-1]
        jnp.stack([zero,    zero,    M[0, 2]]),   # tap x[j-2]
        jnp.stack([M[1, 0], M[2, 1], zero]),      # tap x[j+1]
        jnp.stack([M[2, 0], zero,    zero]),      # tap x[j+2]
        jnp.stack([b[0],    b[1],    b[2]]),      # bias
    ])
    coef = tbl[:, phase]                                     # (6, C), tiny

    # Minor-dim merge only (no transpose / pad): interleaved RGB rows.
    x = image.reshape(H, C)

    block_rows = _pick_block_rows(H, C * 4)
    grid = (pl.cdiv(H, block_rows),)

    out = pl.pallas_call(
        _exposure_kernel,
        out_shape=jax.ShapeDtypeStruct((H, C), image.dtype),
        grid=grid,
        in_specs=[
            pl.BlockSpec((6, C), lambda i: (0, 0)),              # resident
            pl.BlockSpec((block_rows, C), lambda i: (i, 0)),     # pixel rows
        ],
        out_specs=pl.BlockSpec((block_rows, C), lambda i: (i, 0)),
        compiler_params=pltpu.CompilerParams(
            dimension_semantics=("parallel",),
            # ~4 MiB blocks, double-buffered in+out ≈ 17 MiB: explicit budget
            # keeps the same tiling safe on v7x's smaller VMEM.
            vmem_limit_bytes=32 * 1024 * 1024,
        ),
    )(coef, x)

    return out.reshape(H, W, 3)


def learnable_exposure_rgb_forward(image, exposure_factor, indices=None):
    """Matches LearnableExposureRGBModel.forward (indices=None -> identity)."""
    if indices is None:
        return image
    return _exposure_forward(image, exposure_factor, indices)


def _reference_forward(image, exposure_factor, indices):
    """Pure-JAX reference mirroring the PyTorch code exactly."""
    ef = exposure_factor[indices[0]]
    out = image @ ef[:3, :3] + ef[None, None, :3, 3]
    return jnp.clip(out, 0.0, 1.0)


if __name__ == "__main__":
    key = jax.random.PRNGKey(0)
    k_img, k_pert = jax.random.split(key)

    # Small shapes: 64x128 RGB image (3W = 384 lanes, lane-dense), 4 cameras.
    H, W, num_cameras = 64, 128, 4
    image = jax.random.uniform(k_img, (H, W, 3), dtype=jnp.float32,
                               minval=-0.2, maxval=1.2)  # exercises the clamp

    # Parameter init per the module's __init__: eye(3, 4) repeated per camera,
    # plus a small deterministic perturbation so the transform is non-trivial.
    eye34 = jnp.eye(3, 4, dtype=jnp.float32)
    exposure_factor = (
        jnp.tile(eye34[None], (num_cameras, 1, 1))
        + 0.05 * jax.random.normal(k_pert, (num_cameras, 3, 4),
                                   dtype=jnp.float32)
    )
    indices = jnp.array([1], dtype=jnp.int32)

    out = learnable_exposure_rgb_forward(image, exposure_factor, indices)
    out = jax.block_until_ready(out)

    ref = _reference_forward(image, exposure_factor, indices)
    assert out.shape == ref.shape == (H, W, 3)
    assert jnp.allclose(out, ref, atol=1e-5, rtol=1e-5), (
        float(jnp.max(jnp.abs(out - ref))))

    # identity path (indices is None)
    assert learnable_exposure_rgb_forward(image, exposure_factor) is image

    print("KERNEL_OK")
</pallas_src>

<mosaic_0001>
module attributes {stable_mosaic.version = 11 : i64} {
  func.func @_exposure_kernel(%arg0: i32, %arg1: memref<6x384xf32, #tpu.memory_space<vmem>>, %arg2: memref<16x384xf32, #tpu.memory_space<vmem>>, %arg3: memref<16x384xf32, #tpu.memory_space<vmem>>) attributes {dimension_semantics = [#tpu.dimension_semantics<parallel>], iteration_bounds = array<i64: 4>, scalar_prefetch = 0 : i64, scratch_operands = 0 : i64, tpu.core_type = #tpu.core_type<tc>, window_params = [{pipeline_mode = #tpu.pipeline_mode<synchronous>, transform_indices = @transform_0, window_bounds = array<i64: 6, 384>}, {transform_indices = @transform_1, window_bounds = array<i64: 16, 384>}, {transform_indices = @transform_2, window_bounds = array<i64: 16, 384>}]} {
    %c0 = arith.constant 0 : index
    %c0_0 = arith.constant 0 : index
    %0 = vector.load %arg2[%c0, %c0_0] : memref<16x384xf32, #tpu.memory_space<vmem>>, vector<16x384xf32>
    %c0_1 = arith.constant 0 : index
    %c0_2 = arith.constant 0 : index
    %1 = vector.load %arg1[%c0_1, %c0_2] : memref<6x384xf32, #tpu.memory_space<vmem>>, vector<1x384xf32>
    %c1 = arith.constant 1 : index
    %c0_3 = arith.constant 0 : index
    %2 = vector.load %arg1[%c1, %c0_3] : memref<6x384xf32, #tpu.memory_space<vmem>>, vector<1x384xf32>
    %c2 = arith.constant 2 : index
    %c0_4 = arith.constant 0 : index
    %3 = vector.load %arg1[%c2, %c0_4] : memref<6x384xf32, #tpu.memory_space<vmem>>, vector<1x384xf32>
    %c3 = arith.constant 3 : index
    %c0_5 = arith.constant 0 : index
    %4 = vector.load %arg1[%c3, %c0_5] : memref<6x384xf32, #tpu.memory_space<vmem>>, vector<1x384xf32>
    %c4 = arith.constant 4 : index
    %c0_6 = arith.constant 0 : index
    %5 = vector.load %arg1[%c4, %c0_6] : memref<6x384xf32, #tpu.memory_space<vmem>>, vector<1x384xf32>
    %c5 = arith.constant 5 : index
    %c0_7 = arith.constant 0 : index
    %6 = vector.load %arg1[%c5, %c0_7] : memref<6x384xf32, #tpu.memory_space<vmem>>, vector<1x384xf32>
    %7 = tpu.iota {dimensions = array<i32: 1>} : vector<8x128xi32>
    %c1_i32 = arith.constant 1 : i32
    %8 = tpu.dynamic_rotate %7 by %c1_i32 dim 1 : vector<8x128xi32>, i32 -> vector<8x128xi32>
    %9 = vector.extract_strided_slice %8 {offsets = [0, 0], sizes = [1, 1], strides = [1, 1]} : vector<8x128xi32> to vector<1x1xi32>
    %c127_i32 = arith.constant 127 : i32
    %10 = vector.broadcast %c127_i32 : i32 to vector<1x1xi32>
    %11 = arith.cmpi eq, %9, %10 : vector<1x1xi32>
    %12 = vector.shape_cast %11 : vector<1x1xi1> to vector<1x1xi1>
    %13 = vector.broadcast %12 : vector<1x1xi1> to vector<1x384xi1>
    %14 = arith.select %13, %2, %4 : vector<1x384xi1>, vector<1x384xf32>
    %15 = vector.shape_cast %11 : vector<1x1xi1> to vector<1x1xi1>
    %16 = vector.broadcast %15 : vector<1x1xi1> to vector<1x384xi1>
    %17 = arith.select %16, %3, %5 : vector<1x384xi1>, vector<1x384xf32>
    %18 = vector.shape_cast %11 : vector<1x1xi1> to vector<1x1xi1>
    %19 = vector.broadcast %18 : vector<1x1xi1> to vector<1x384xi1>
    %20 = arith.select %19, %4, %2 : vector<1x384xi1>, vector<1x384xf32>
    %21 = vector.shape_cast %11 : vector<1x1xi1> to vector<1x1xi1>
    %22 = vector.broadcast %21 : vector<1x1xi1> to vector<1x384xi1>
    %23 = arith.select %22, %5, %3 : vector<1x384xi1>, vector<1x384xf32>
    %24 = vector.broadcast %1 : vector<1x384xf32> to vector<16x384xf32>
    %25 = arith.mulf %24, %0 : vector<16x384xf32>
    %26 = vector.broadcast %6 : vector<1x384xf32> to vector<16x384xf32>
    %27 = arith.addf %25, %26 : vector<16x384xf32>
    %c1_i32_8 = arith.constant 1 : i32
    %28 = tpu.dynamic_rotate %0 by %c1_i32_8 dim 1 : vector<16x384xf32>, i32 -> vector<16x384xf32>
    %29 = vector.broadcast %14 : vector<1x384xf32> to vector<16x384xf32>
    %30 = arith.mulf %29, %28 : vector<16x384xf32>
    %31 = arith.addf %27, %30 : vector<16x384xf32>
    %c2_i32 = arith.constant 2 : i32
    %32 = tpu.dynamic_rotate %0 by %c2_i32 dim 1 : vector<16x384xf32>, i32 -> vector<16x384xf32>
    %33 = vector.broadcast %17 : vector<1x384xf32> to vector<16x384xf32>
    %34 = arith.mulf %33, %32 : vector<16x384xf32>
    %35 = arith.addf %31, %34 : vector<16x384xf32>
    %c383_i32 = arith.constant 383 : i32
    %36 = tpu.dynamic_rotate %0 by %c383_i32 dim 1 : vector<16x384xf32>, i32 -> vector<16x384xf32>
    %37 = vector.broadcast %20 : vector<1x384xf32> to vector<16x384xf32>
    %38 = arith.mulf %37, %36 : vector<16x384xf32>
    %39 = arith.addf %35, %38 : vector<16x384xf32>
    %c382_i32 = arith.constant 382 : i32
    %40 = tpu.dynamic_rotate %0 by %c382_i32 dim 1 : vector<16x384xf32>, i32 -> vector<16x384xf32>
    %41 = vector.broadcast %23 : vector<1x384xf32> to vector<16x384xf32>
    %42 = arith.mulf %41, %40 : vector<16x384xf32>
    %43 = arith.addf %39, %42 : vector<16x384xf32>
    %cst = arith.constant 0.000000e+00 : f32
    %cst_9 = arith.constant 1.000000e+00 : f32
    %44 = vector.broadcast %cst : f32 to vector<16x384xf32>
    %45 = arith.maximumf %44, %43 : vector<16x384xf32>
    %46 = vector.broadcast %cst_9 : f32 to vector<16x384xf32>
    %47 = arith.minimumf %46, %45 : vector<16x384xf32>
    %c0_10 = arith.constant 0 : index
    %c0_11 = arith.constant 0 : index
    %48 = vector.load %arg3[%c0_10, %c0_11] : memref<16x384xf32, #tpu.memory_space<vmem>>, vector<16x384xf32>
    tpu.vector_store %arg3[%c0_10, %c0_11], %47 {strides = array<i32>} : memref<16x384xf32, #tpu.memory_space<vmem>>, vector<16x384xf32>,
    return
  }
  func.func @transform_0(%arg0: i32) -> (i32, i32) {
    %c0_i32 = arith.constant 0 : i32
    %c0_i32_0 = arith.constant 0 : i32
    %c0_i32_1 = arith.constant 0 : i32
    return %c0_i32, %c0_i32_0 : i32, i32
  }
  func.func @transform_1(%arg0: i32) -> (i32, i32) {
    %c0_i32 = arith.constant 0 : i32
    %c0_i32_0 = arith.constant 0 : i32
    return %arg0, %c0_i32 : i32, i32
  }
  func.func @transform_2(%arg0: i32) -> (i32, i32) {
    %c0_i32 = arith.constant 0 : i32
    %c0_i32_0 = arith.constant 0 : i32
    return %arg0, %c0_i32 : i32, i32
  }
}

</mosaic_0001>

<llo_original>
// kernel: _exposure_forward.1
$region0: #{_exposure_forward.1}
  #allocation0 [shape = 'u32[]', space=smem, size = 0x4, offset = 0x4, fixed_abs, tag = 'smem constant byte address 0x4 - core index']
  #allocation1 [shape = 'u32[144,128]{1,0:T(1,128)}', space=vmem, size = 0x12000, scoped, tag = 'internal scratch']
  %s0 = inlined_call_operand.vmem [shape: f32[6,384], index: 0, kind: input, shape index: {}]
  %s1 = inlined_call_operand.vmem [shape: f32[64,384], index: 1, kind: input, shape index: {}]
  %s2 = inlined_call_operand.vmem [shape: f32[64,384], index: 2, kind: output, shape index: {}]
  %s3 = sld [smem:[#allocation0]]
  $region41: #{_exposure_forward.1} parent=0
    _
  %s5 = ssub.s32 1, %s3
  %s6 = scalar_select 0, %s5, %s3
  loop: start=0, step=1, limit=6
  $region2: #{_exposure_forward.1} parent=0 // loop_pre_header
    _
  $region3: #{_exposure_forward.1} parent=0 // loop_header
    %s8 = sphi 0, %s12
    %p9 = scmp.ge.s32.totalorder %s8, 6
    %s16 = sphi 0, %s16
    %s18 = sphi 0, %s16
    %s19 = sphi 0, %s18
    %s33 = sphi 0, %s19
    %s39 = sphi 0, %s41
    %s42 = sphi 0, %s39
    %s43 = sphi 0, %s42
    %s59 = sphi 0, %s43
    %s65 = sphi 0, %s67
    %s68 = sphi 0, %s65
    %s69 = sphi 0, %s68
    %s85 = sphi 0, %s69
  $region4: #{_exposure_forward.1} parent=0 // loop_header_branch
    %11 = sbr.rel (%p9) target = $region8
  $region5: #{_exposure_forward.1} parent=0 // loop_body
    %s13 = ssub.s32 %s8, 1
    %s14 = ssub.s32 %s8, 2
    %s15 = sadd.s32 %s8, 1
    %s17 = sadd.s32 %s16, 1
    %p20 = scmp.eq.s32.totalorder %s8, 3
    %p21 = scmp.ne.s32.totalorder %s16, %s18
    %p22 = scmp.eq.s32.totalorder %s8, 0
    %p23 = por %p21, %p22
    %p24 = scmp.ne.s32.totalorder %s16, %s18
    %p25 = scmp.eq.s32.totalorder %s13, 3
    %p26 = por %p24, %p25
    %p27 = scmp.ne.s32.totalorder %s18, %s19
    %p28 = scmp.eq.s32.totalorder %s13, 0
    %p29 = por %p27, %p28
    %p30 = scmp.ne.s32.totalorder %s18, %s19
    %p31 = scmp.eq.s32.totalorder %s14, 3
    %p32 = por %p30, %p31
    %p34 = scmp.ne.s32.totalorder %s19, %s33
    %p35 = scmp.eq.s32.totalorder %s14, 0
    %p36 = por %p34, %p35
    %s37 = ssub.s32 %s8, %s15
    %p38 = scmp.eq.s32.totalorder %s37, 0
    %s40 = sadd.s32 %s39, 1
    %s41 = scalar_select %p38, %s39, %s40
    %p44 = pneg %p38
    %p45 = scmp.eq.s32.totalorder %s8, 3
    %p46 = por %p44, %p45
    %p47 = scmp.ne.s32.totalorder %s39, %s42
    %p48 = scmp.eq.s32.totalorder %s8, 0
    %p49 = por %p47, %p48
    %p50 = scmp.ne.s32.totalorder %s39, %s42
    %p51 = scmp.eq.s32.totalorder %s13, 3
    %p52 = por %p50, %p51
    %p53 = scmp.ne.s32.totalorder %s42, %s43
    %p54 = scmp.eq.s32.totalorder %s13, 0
    %p55 = por %p53, %p54
    %p56 = scmp.ne.s32.totalorder %s42, %s43
    %p57 = scmp.eq.s32.totalorder %s14, 3
    %p58 = por %p56, %p57
    %p60 = scmp.ne.s32.totalorder %s43, %s59
    %p61 = scmp.eq.s32.totalorder %s14, 0
    %p62 = por %p60, %p61
    %s63 = ssub.s32 %s8, %s15
    %p64 = scmp.eq.s32.totalorder %s63, 0
    %s66 = sadd.s32 %s65, 1
    %s67 = scalar_select %p64, %s65, %s66
    %p70 = pneg %p64
    %p71 = scmp.eq.s32.totalorder %s8, 3
    %p72 = por %p70, %p71
    %p73 = scmp.ne.s32.totalorder %s65, %s68
    %p74 = scmp.eq.s32.totalorder %s8, 0
    %p75 = por %p73, %p74
    %p76 = scmp.ne.s32.totalorder %s65, %s68
    %p77 = scmp.eq.s32.totalorder %s13, 3
    %p78 = por %p76, %p77
    %p79 = scmp.ne.s32.totalorder %s68, %s69
    %p80 = scmp.eq.s32.totalorder %s13, 0
    %p81 = por %p79, %p80
    %p82 = scmp.ne.s32.totalorder %s68, %s69
    %p83 = scmp.eq.s32.totalorder %s14, 3
    %p84 = por %p82, %p83
    %p86 = scmp.ne.s32.totalorder %s69, %s85
    %p87 = scmp.eq.s32.totalorder %s14, 0
    %p88 = por %p86, %p87
    %p89 = scmp.le.s32.totalorder 1, %s8
    %p90 = scmp.lt.s32.totalorder %s8, 5
    %p91 = pnand %p89, %p90
    %p92 = pneg %p91
    // Predicated region
    $region9: #{_exposure_forward.1} parent=5 // pred_check
      _
    $region10: #{_exposure_forward.1} parent=5 // pred_check_branch
      %94 = sbr.rel (%p91) target = $region12
    $region11: #{_exposure_forward.1} parent=5 // pred_region
      %s95 = ssub.s32 %s8, 1
      // Predicated region
      $region13: #{_exposure_forward.1} parent=11 // pred_check
        %p96 = pneg %p29
      $region14: #{_exposure_forward.1} parent=11 // pred_check_branch
        %98 = sbr.rel (%p96) target = $region16
      $region15: #{_exposure_forward.1} parent=11 // pred_region
        _
      $region16: #{_exposure_forward.1} parent=11 // pred_fallthru
        _
    $region12: #{_exposure_forward.1} parent=5 // pred_fallthru
      _
    %p99 = scmp.lt.s32.totalorder %s8, 4
    // Predicated region
    $region17: #{_exposure_forward.1} parent=5 // pred_check
      %p100 = pneg %p99
    $region18: #{_exposure_forward.1} parent=5 // pred_check_branch
      %102 = sbr.rel (%p100) target = $region20
    $region19: #{_exposure_forward.1} parent=5 // pred_region
      // Predicated region
      $region21: #{_exposure_forward.1} parent=19 // pred_check
        %p103 = pneg %p49
      $region22: #{_exposure_forward.1} parent=19 // pred_check_branch
        %105 = sbr.rel (%p103) target = $region24
      $region23: #{_exposure_forward.1} parent=19 // pred_region
        %s106 = smul.u32 2, %s8
        %p107 = scmp.lt.s32.totalorder %s106, 7
        %s108 = scalar_select %p107, %s106, 7
        %s109 = smul.addr %s108, 3
        %s110 = smul.addr %s109, 8
        %s111 = scalar_lea.vmem %s1, %s110
        %s112 = smul.u32 2, %s8
      $region24: #{_exposure_forward.1} parent=19 // pred_fallthru
        _
    $region20: #{_exposure_forward.1} parent=5 // pred_fallthru
      _
    %p113 = scmp.le.s32.totalorder 1, %s8
    %p114 = scmp.lt.s32.totalorder %s8, 5
    %p115 = pnand %p113, %p114
    %p116 = pneg %p115
    // Predicated region
    $region25: #{_exposure_forward.1} parent=5 // pred_check
      _
    $region26: #{_exposure_forward.1} parent=5 // pred_check_branch
      %118 = sbr.rel (%p115) target = $region28
    $region27: #{_exposure_forward.1} parent=5 // pred_region
      %s119 = ssub.s32 %s8, 1
      %p120 = pneg %p29
      %p121 = pneg %p26
      %s122 = smul.u32 2, %s13
      %p123 = scmp.lt.s32.totalorder %s122, 7
      %s124 = scalar_select %p123, %s122, 7
      %s125 = smul.addr %s124, 3
      %s126 = smul.addr %s125, 8
      %s127 = scalar_lea.vmem %s1, %s126
      %p128 = pneg %p55
      %p129 = pneg %p52
      %p130 = pneg %p81
      %p131 = pneg %p78
      %s132 = smul.u32 2, %s13
      %p133 = scmp.lt.s32.totalorder %s132, 7
      %s134 = scalar_select %p133, %s132, 7
      %s135 = smul.addr %s134, 3
      %s136 = smul.addr %s135, 8
      %s137 = scalar_lea.vmem %s2, %s136
      %s138 = smul.u32 2, %s13
      %p139 = scmp.lt.s32.totalorder %s138, 7
      %s140 = scalar_select %p139, %s138, 7
      %s141 = smul.addr %s140, 3
      %s142 = smul.addr %s141, 8
      %s143 = scalar_lea.vmem %s1, %s142
      %s144 = smul.u32 2, %s13
      %s145 = smul.u32 2, %s13
      %p146 = scmp.lt.s32.totalorder %s145, 7
      %s147 = scalar_select %p146, %s145, 7
      %s148 = smul.addr %s147, 3
      %s149 = smul.addr %s148, 8
      %s150 = scalar_lea.vmem %s2, %s149
      %s151 = smul.u32 2, %s13
      %v152 = vld [vmem:[%s143] sm:$0xff]
      %v153 = vld [vmem:[%s143 + $0x8] sm:$0xff]
      %v154 = vld [vmem:[%s143 + $0x10] sm:$0xff]
      %v155 = vld [vmem:[%s143 + $0x18] sm:$0xff]
      %v156 = vld [vmem:[%s143 + $0x20] sm:$0xff]
      %v157 = vld [vmem:[%s143 + $0x28] sm:$0xff]
      %v158 = vld [vmem:[%s0] ss:$8 sm:$0x7]
      %s159 = scalar_lea.vmem %s0, 1
      %v160 = vld [vmem:[%s159] ss:$8 sm:$0x7]
      %s161 = scalar_lea.vmem %s0, 2
      %v162 = vld [vmem:[%s161] ss:$8 sm:$0x7]
      %s163 = scalar_lea.vmem %s0, 3
      %v164 = vld [vmem:[%s163] ss:$8 sm:$0x7]
      %s165 = scalar_lea.vmem %s0, 4
      %v166 = vld [vmem:[%s165] ss:$8 sm:$0x7]
      %s167 = scalar_lea.vmem %s0, 5
      %v168 = vld [vmem:[%s167] ss:$8 sm:$0x7]
      %v169 = vlaneseq
      %v170 = vand.u32 %v169, 127
      %171 = vrot.lane.b32.xlu0 %v170, 1
      %v172 = vpop.permute.xlu0 %171
      %vm173 = vcmp.eq.s32.totalorder %v172, 127
      %v174 = vsel %vm173, 1, 0
      %175 = vset.pattern.permute.xlu0 0
      %176 = vperm.xlu0 %175, %v174
      %v177 = vpop.permute.xlu0 %176
      %vm178 = vcmp.eq.s32.totalorder %v177, 1
      %v180 = vlaneseq
      %v181 = vshrl.u32 %v180, 7
      %v182 = vsub.s32 0, %v181
      %v183 = vrot.slane %v160, %v182
      %v184 = vlaneseq
      %v185 = vshrl.u32 %v184, 7
      %v186 = vsub.s32 1, %v185
      %v187 = vrot.slane %v160, %v186
      %v188 = vlaneseq
      %v189 = vshrl.u32 %v188, 7
      %v190 = vsub.s32 2, %v189
      %v191 = vrot.slane %v160, %v190
      %v196 = vlaneseq
      %v197 = vshrl.u32 %v196, 7
      %v198 = vsub.s32 0, %v197
      %v199 = vrot.slane %v164, %v198
      %v200 = vlaneseq
      %v201 = vshrl.u32 %v200, 7
      %v202 = vsub.s32 1, %v201
      %v203 = vrot.slane %v164, %v202
      %v204 = vlaneseq
      %v205 = vshrl.u32 %v204, 7
      %v206 = vsub.s32 2, %v205
      %v207 = vrot.slane %v164, %v206
      %v211 = vsel %vm178, %v183, %v199
      %v212 = vsel %vm178, %v187, %v203
      %v213 = vsel %vm178, %v191, %v207
      %v215 = vlaneseq
      %v216 = vshrl.u32 %v215, 7
      %v217 = vsub.s32 0, %v216
      %v218 = vrot.slane %v162, %v217
      %v219 = vlaneseq
      %v220 = vshrl.u32 %v219, 7
      %v221 = vsub.s32 1, %v220
      %v222 = vrot.slane %v162, %v221
      %v223 = vlaneseq
      %v224 = vshrl.u32 %v223, 7
      %v225 = vsub.s32 2, %v224
      %v226 = vrot.slane %v162, %v225
      %v231 = vlaneseq
      %v232 = vshrl.u32 %v231, 7
      %v233 = vsub.s32 0, %v232
      %v234 = vrot.slane %v166, %v233
      %v235 = vlaneseq
      %v236 = vshrl.u32 %v235, 7
      %v237 = vsub.s32 1, %v236
      %v238 = vrot.slane %v166, %v237
      %v239 = vlaneseq
      %v240 = vshrl.u32 %v239, 7
      %v241 = vsub.s32 2, %v240
      %v242 = vrot.slane %v166, %v241
      %v246 = vsel %vm178, %v218, %v234
      %v247 = vsel %vm178, %v222, %v238
      %v248 = vsel %vm178, %v226, %v242
      %v249 = vsel %vm178, %v199, %v183
      %v250 = vsel %vm178, %v203, %v187
      %v251 = vsel %vm178, %v207, %v191
      %v252 = vsel %vm178, %v234, %v218
      %v253 = vsel %vm178, %v238, %v222
      %v254 = vsel %vm178, %v242, %v226
      %v256 = vlaneseq
      %v257 = vshrl.u32 %v256, 7
      %v258 = vsub.s32 0, %v257
      %v259 = vrot.slane %v158, %v258
      %v260 = vlaneseq
      %v261 = vshrl.u32 %v260, 7
      %v262 = vsub.s32 1, %v261
      %v263 = vrot.slane %v158, %v262
      %v264 = vlaneseq
      %v265 = vshrl.u32 %v264, 7
      %v266 = vsub.s32 2, %v265
      %v267 = vrot.slane %v158, %v266
      %v271 = vmul.f32 %v259, %v152
      %v272 = vmul.f32 %v263, %v153
      %v273 = vmul.f32 %v267, %v154
      %v274 = vmul.f32 %v259, %v155
      %v275 = vmul.f32 %v263, %v156
      %v276 = vmul.f32 %v267, %v157
      %v278 = vlaneseq
      %v279 = vshrl.u32 %v278, 7
      %v280 = vsub.s32 0, %v279
      %v281 = vrot.slane %v168, %v280
      %v282 = vlaneseq
      %v283 = vshrl.u32 %v282, 7
      %v284 = vsub.s32 1, %v283
      %v285 = vrot.slane %v168, %v284
      %v286 = vlaneseq
      %v287 = vshrl.u32 %v286, 7
      %v288 = vsub.s32 2, %v287
      %v289 = vrot.slane %v168, %v288
      %v293 = vadd.f32 %v271, %v281
      %v294 = vadd.f32 %v272, %v285
      %v295 = vadd.f32 %v273, %v289
      %v296 = vadd.f32 %v274, %v281
      %v297 = vadd.f32 %v275, %v285
      %v298 = vadd.f32 %v276, %v289
      %299 = vrot.lane.b32.xlu0 %v152, 1
      %v300 = vpop.permute.xlu0 %299
      %301 = vrot.lane.b32.xlu0 %v155, 1
      %v302 = vpop.permute.xlu0 %301
      %303 = vrot.lane.b32.xlu0 %v153, 1
      %v304 = vpop.permute.xlu0 %303
      %305 = vrot.lane.b32.xlu0 %v156, 1
      %v306 = vpop.permute.xlu0 %305
      %307 = vrot.lane.b32.xlu0 %v154, 1
      %v308 = vpop.permute.xlu0 %307
      %309 = vrot.lane.b32.xlu0 %v157, 1
      %v310 = vpop.permute.xlu0 %309
      %vm311 = vcmp.lt.s32.totalorder %v170, 1
      %v312 = vsel %vm311, %v304, %v308
      %v313 = vsel %vm311, %v306, %v310
      %v314 = vsel %vm311, %v300, %v304
      %v315 = vsel %vm311, %v302, %v306
      %v316 = vsel %vm311, %v308, %v300
      %v317 = vsel %vm311, %v310, %v302
      %v318 = vlaneseq
      %v319 = vshrl.u32 %v318, 7
      %v320 = vsub.s32 0, %v319
      %v321 = vrot.slane %v211, %v320
      %v322 = vlaneseq
      %v323 = vshrl.u32 %v322, 7
      %v324 = vsub.s32 0, %v323
      %v325 = vrot.slane %v212, %v324
      %v326 = vlaneseq
      %v327 = vshrl.u32 %v326, 7
      %v328 = vsub.s32 0, %v327
      %v329 = vrot.slane %v213, %v328
      %v330 = vmul.f32 %v321, %v316
      %v331 = vmul.f32 %v325, %v314
      %v332 = vmul.f32 %v329, %v312
      %v333 = vmul.f32 %v321, %v317
      %v334 = vmul.f32 %v325, %v315
      %v335 = vmul.f32 %v329, %v313
      %v336 = vadd.f32 %v293, %v330
      %v337 = vadd.f32 %v294, %v331
      %v338 = vadd.f32 %v295, %v332
      %v339 = vadd.f32 %v296, %v333
      %v340 = vadd.f32 %v297, %v334
      %v341 = vadd.f32 %v298, %v335
      %342 = vrot.lane.b32.xlu0 %v152, 2
      %v343 = vpop.permute.xlu0 %342
      %344 = vrot.lane.b32.xlu0 %v155, 2
      %v345 = vpop.permute.xlu0 %344
      %346 = vrot.lane.b32.xlu0 %v153, 2
      %v347 = vpop.permute.xlu0 %346
      %348 = vrot.lane.b32.xlu0 %v156, 2
      %v349 = vpop.permute.xlu0 %348
      %350 = vrot.lane.b32.xlu0 %v154, 2
      %v351 = vpop.permute.xlu0 %350
      %352 = vrot.lane.b32.xlu0 %v157, 2
      %v353 = vpop.permute.xlu0 %352
      %vm354 = vcmp.lt.s32.totalorder %v170, 2
      %v355 = vsel %vm354, %v347, %v351
      %v356 = vsel %vm354, %v349, %v353
      %v357 = vsel %vm354, %v343, %v347
      %v358 = vsel %vm354, %v345, %v349
      %v359 = vsel %vm354, %v351, %v343
      %v360 = vsel %vm354, %v353, %v345
      %v361 = vlaneseq
      %v362 = vshrl.u32 %v361, 7
      %v363 = vsub.s32 0, %v362
      %v364 = vrot.slane %v246, %v363
      %v365 = vlaneseq
      %v366 = vshrl.u32 %v365, 7
      %v367 = vsub.s32 0, %v366
      %v368 = vrot.slane %v247, %v367
      %v369 = vlaneseq
      %v370 = vshrl.u32 %v369, 7
      %v371 = vsub.s32 0, %v370
      %v372 = vrot.slane %v248, %v371
      %v373 = vmul.f32 %v364, %v359
      %v374 = vmul.f32 %v368, %v357
      %v375 = vmul.f32 %v372, %v355
      %v376 = vmul.f32 %v364, %v360
      %v377 = vmul.f32 %v368, %v358
      %v378 = vmul.f32 %v372, %v356
      %v379 = vadd.f32 %v336, %v373
      %v380 = vadd.f32 %v337, %v374
      %v381 = vadd.f32 %v338, %v375
      %v382 = vadd.f32 %v339, %v376
      %v383 = vadd.f32 %v340, %v377
      %v384 = vadd.f32 %v341, %v378
      %385 = vrot.lane.b32.xlu0 %v152, 127
      %v386 = vpop.permute.xlu0 %385
      %387 = vrot.lane.b32.xlu0 %v155, 127
      %v388 = vpop.permute.xlu0 %387
      %389 = vrot.lane.b32.xlu0 %v153, 127
      %v390 = vpop.permute.xlu0 %389
      %391 = vrot.lane.b32.xlu0 %v156, 127
      %v392 = vpop.permute.xlu0 %391
      %393 = vrot.lane.b32.xlu0 %v154, 127
      %v394 = vpop.permute.xlu0 %393
      %395 = vrot.lane.b32.xlu0 %v157, 127
      %v396 = vpop.permute.xlu0 %395
      %vm397 = vcmp.lt.s32.totalorder %v170, 127
      %v398 = vsel %vm397, %v390, %v394
      %v399 = vsel %vm397, %v392, %v396
      %v400 = vsel %vm397, %v386, %v390
      %v401 = vsel %vm397, %v388, %v392
      %v402 = vsel %vm397, %v394, %v386
      %v403 = vsel %vm397, %v396, %v388
      %v404 = vlaneseq
      %v405 = vshrl.u32 %v404, 7
      %v406 = vsub.s32 0, %v405
      %v407 = vrot.slane %v249, %v406
      %v408 = vlaneseq
      %v409 = vshrl.u32 %v408, 7
      %v410 = vsub.s32 0, %v409
      %v411 = vrot.slane %v250, %v410
      %v412 = vlaneseq
      %v413 = vshrl.u32 %v412, 7
      %v414 = vsub.s32 0, %v413
      %v415 = vrot.slane %v251, %v414
      %v416 = vmul.f32 %v407, %v400
      %v417 = vmul.f32 %v411, %v398
      %v418 = vmul.f32 %v415, %v402
      %v419 = vmul.f32 %v407, %v401
      %v420 = vmul.f32 %v411, %v399
      %v421 = vmul.f32 %v415, %v403
      %v422 = vadd.f32 %v379, %v416
      %v423 = vadd.f32 %v380, %v417
      %v424 = vadd.f32 %v381, %v418
      %v425 = vadd.f32 %v382, %v419
      %v426 = vadd.f32 %v383, %v420
      %v427 = vadd.f32 %v384, %v421
      %428 = vrot.lane.b32.xlu0 %v152, 126
      %v429 = vpop.permute.xlu0 %428
      %430 = vrot.lane.b32.xlu0 %v155, 126
      %v431 = vpop.permute.xlu0 %430
      %432 = vrot.lane.b32.xlu0 %v153, 126
      %v433 = vpop.permute.xlu0 %432
      %434 = vrot.lane.b32.xlu0 %v156, 126
      %v435 = vpop.permute.xlu0 %434
      %436 = vrot.lane.b32.xlu0 %v154, 126
      %v437 = vpop.permute.xlu0 %436
      %438 = vrot.lane.b32.xlu0 %v157, 126
      %v439 = vpop.permute.xlu0 %438
      %vm440 = vcmp.lt.s32.totalorder %v170, 126
      %v441 = vsel %vm440, %v433, %v437
      %v442 = vsel %vm440, %v435, %v439
      %v443 = vsel %vm440, %v429, %v433
      %v444 = vsel %vm440, %v431, %v435
      %v445 = vsel %vm440, %v437, %v429
      %v446 = vsel %vm440, %v439, %v431
      %v447 = vlaneseq
      %v448 = vshrl.u32 %v447, 7
      %v449 = vsub.s32 0, %v448
      %v450 = vrot.slane %v252, %v449
      %v451 = vlaneseq
      %v452 = vshrl.u32 %v451, 7
      %v453 = vsub.s32 0, %v452
      %v454 = vrot.slane %v253, %v453
      %v455 = vlaneseq
      %v456 = vshrl.u32 %v455, 7
      %v457 = vsub.s32 0, %v456
      %v458 = vrot.slane %v254, %v457
      %v459 = vmul.f32 %v450, %v443
      %v460 = vmul.f32 %v454, %v441
      %v461 = vmul.f32 %v458, %v445
      %v462 = vmul.f32 %v450, %v444
      %v463 = vmul.f32 %v454, %v442
      %v464 = vmul.f32 %v458, %v446
      %v465 = vadd.f32 %v422, %v459
      %v466 = vadd.f32 %v423, %v460
      %v467 = vadd.f32 %v424, %v461
      %v468 = vadd.f32 %v425, %v462
      %v469 = vadd.f32 %v426, %v463
      %v470 = vadd.f32 %v427, %v464
      %v471 = vmax.f32 %v465, 0.0
      %v472 = vmax.f32 %v466, 0.0
      %v473 = vmax.f32 %v467, 0.0
      %v474 = vmax.f32 %v468, 0.0
      %v475 = vmax.f32 %v469, 0.0
      %v476 = vmax.f32 %v470, 0.0
      %v477 = vmin.f32 %v471, 1.0
      %v478 = vmin.f32 %v472, 1.0
      %v479 = vmin.f32 %v473, 1.0
      %v480 = vmin.f32 %v474, 1.0
      %v481 = vmin.f32 %v475, 1.0
      %v482 = vmin.f32 %v476, 1.0
      %483 = vst [vmem:[%s150] sm:$0xff] %v477
      %484 = vst [vmem:[%s150 + $0x8] sm:$0xff] %v478
      %485 = vst [vmem:[%s150 + $0x10] sm:$0xff] %v479
      %486 = vst [vmem:[%s150 + $0x18] sm:$0xff] %v480
      %487 = vst [vmem:[%s150 + $0x20] sm:$0xff] %v481
      %488 = vst [vmem:[%s150 + $0x28] sm:$0xff] %v482
      %s489 = smul.u32 2, %s13
      %p490 = scmp.lt.s32.totalorder %s489, 7
      %s491 = scalar_select %p490, %s489, 7
      %s492 = smul.addr %s491, 3
      %s493 = smul.addr %s492, 8
      %s494 = scalar_lea.vmem %s2, %s493
      // Predicated region
      $region29: #{_exposure_forward.1} parent=27 // pred_check
        %p495 = pneg %p78
      $region30: #{_exposure_forward.1} parent=27 // pred_check_branch
        %497 = sbr.rel (%p495) target = $region32
      $region31: #{_exposure_forward.1} parent=27 // pred_region
        %s498 = smul.u32 2, %s13
      $region32: #{_exposure_forward.1} parent=27 // pred_fallthru
        _
    $region28: #{_exposure_forward.1} parent=5 // pred_fallthru
      _
    %p499 = scmp.le.s32.totalorder 2, %s8
    // Predicated region
    $region33: #{_exposure_forward.1} parent=5 // pred_check
      %p500 = pneg %p499
    $region34: #{_exposure_forward.1} parent=5 // pred_check_branch
      %502 = sbr.rel (%p500) target = $region36
    $region35: #{_exposure_forward.1} parent=5 // pred_region
      %s503 = ssub.s32 %s8, 2
      // Predicated region
      $region37: #{_exposure_forward.1} parent=35 // pred_check
        %p504 = pneg %p84
      $region38: #{_exposure_forward.1} parent=35 // pred_check_branch
        %506 = sbr.rel (%p504) target = $region40
      $region39: #{_exposure_forward.1} parent=35 // pred_region
        %s507 = smul.u32 2, %s14
        %p508 = scmp.lt.s32.totalorder %s507, 7
        %s509 = scalar_select %p508, %s507, 7
        %s510 = smul.addr %s509, 3
        %s511 = smul.addr %s510, 8
        %s512 = scalar_lea.vmem %s2, %s511
      $region40: #{_exposure_forward.1} parent=35 // pred_fallthru
        _
    $region36: #{_exposure_forward.1} parent=5 // pred_fallthru
      _
  $region6: #{_exposure_forward.1} parent=0 // loop_footer
    %s12 = sadd.s32 1, %s8
  $region7: #{_exposure_forward.1} parent=0 // loop_footer_branch
    %7 = sbr.rel target = $region3
  $region8: #{_exposure_forward.1} parent=0 // loop_exit
    _

</llo_original>
